<compile_context>
chip_gen: v7x
topology: tpu7x:2x2x1
jax: 0.10.0
libtpu: 0.0.40
codegen_flags: <defaults>
</compile_context>

<pallas_src>
import jax
import jax.numpy as jnp
from jax.experimental import pallas as pl
from jax.experimental.pallas import tpu as pltpu

N, C, L_IN = 1, 3, 6        # input shape from the reference script: (1, 3, 6)
K = 3                       # Conv1d kernel size
L1 = L_IN - K + 1           # length after conv1 -> 4
L2 = L1 - K + 1             # length after conv2 -> 2
BN_EPS = 1e-5

# Column layout of the packed (C, P_COLS) parameter tile (row = output channel):
#   cols [0, 9)  : w1[o, i, k]            at column  i*K + k      (conv1, no bias)
#   cols [9, 18) : (w2 * gamma[i])[o,i,k] at column  9 + i*K + k  (conv2, gamma folded)
#   col  18      : b2[o] + sum_{i,k} w2[o,i,k] * beta[i]          (conv2 bias, beta folded)
_W1_COL = 0
_W2_COL = C * K
_B2_COL = 2 * C * K
_P_COLS = _B2_COL + 1        # 19


def model_kernel(x_ref, p_ref, o_ref):
    x = x_ref[...]                                   # (3, 6)  f32, already f32
    p = p_ref[...]                                   # (3, 19) f32 packed params

    # conv1 (bias folded away by the BN mean subtraction): (3, 6) -> (3, 4).
    # Vectorized over output channels: (C,1) weight column * (1,L1) input slice.
    acc = jnp.zeros((C, L1), jnp.float32)
    for i in range(C):
        for k in range(K):
            col = _W1_COL + i * K + k
            acc = acc + p[:, col:col + 1] * x[i:i + 1, k:k + L1]

    # BatchNorm1d, training-mode forward: per-channel batch mean / biased var
    # over the (N, L) axes (N == 1 here). gamma/beta already folded into conv2.
    inv_n = jnp.float32(1.0 / (N * L1))
    mean = acc.sum(axis=1, keepdims=True) * inv_n    # (3, 1)  lane reduction
    d = acc - mean
    var = (d * d).sum(axis=1, keepdims=True) * inv_n
    yhat = d * jax.lax.rsqrt(var + BN_EPS)           # rsqrt -> EUP slot (free)

    # conv2 with gamma folded into weights, beta + b2 folded into the bias:
    # (3, 4) -> (3, 2).  Accumulate in a (C, L2) slab, store directly.
    acc2 = jnp.zeros((C, L2), jnp.float32)
    for i in range(C):
        for k in range(K):
            col = _W2_COL + i * K + k
            acc2 = acc2 + p[:, col:col + 1] * yhat[i:i + 1, k:k + L2]
    o_ref[...] = (acc2 + p[:, _B2_COL:_B2_COL + 1]).astype(o_ref.dtype)


def make_model_forward(w1, b1, w2, b2, gamma, beta):
    """One-time parameter folding + packing; returns a jitted fn of x only."""
    # --- trace-time algebraic folding (training-mode / batch-stat BN only) ---
    del b1                                            # cancels under BN mean sub
    w2f = w2 * gamma[None, :, None]                   # fold gamma into conv2 W
    b2f = b2 + (w2 * beta[None, :, None]).sum(axis=(1, 2))   # fold beta (+ b2)
    params = jnp.concatenate(
        [w1.reshape(C, C * K), w2f.reshape(C, C * K), b2f.reshape(C, 1)],
        axis=1).astype(jnp.float32)                   # (3, 19), computed ONCE
    params = jax.device_put(params)                   # cached on device

    call = pl.pallas_call(
        model_kernel,
        out_shape=jax.ShapeDtypeStruct((C, L2), jnp.float32),
        in_specs=[
            pl.BlockSpec(memory_space=pltpu.MemorySpace.VMEM),   # x as (3, 6)
            pl.BlockSpec(memory_space=pltpu.MemorySpace.VMEM),   # packed params
        ],
        out_specs=pl.BlockSpec(memory_space=pltpu.MemorySpace.VMEM),
        cost_estimate=pl.CostEstimate(
            flops=220, transcendentals=3, bytes_accessed=400),
    )

    @jax.jit
    def forward(x):
        out2d = call(x.reshape(C, L_IN), params)
        return out2d.reshape(N, C, L2)

    return forward


def reference_forward(x, w1, b1, w2, b2, gamma, beta):
    """Pure-JAX reference (lax.conv, unfolded params) for cross-checking."""
    def conv(x, w, b):
        y = jax.lax.conv_general_dilated(
            x, w, window_strides=(1,), padding="VALID",
            dimension_numbers=("NCH", "OIH", "NCH"))
        return y + b[None, :, None]

    y = conv(x, w1, b1)
    mean = y.mean(axis=(0, 2), keepdims=True)
    var = ((y - mean) ** 2).mean(axis=(0, 2), keepdims=True)
    y = (y - mean) / jnp.sqrt(var + BN_EPS)
    y = y * gamma[None, :, None] + beta[None, :, None]
    return conv(y, w2, b2)


if __name__ == "__main__":
    key = jax.random.PRNGKey(0)
    kx, k1, k2, k3, k4, k5, k6 = jax.random.split(key, 7)

    # Deterministic synthetic parameters (Conv1d weight shape (Cout, Cin, K)).
    x = jax.random.normal(kx, (N, C, L_IN), dtype=jnp.float32)
    w1 = jax.random.normal(k1, (C, C, K), dtype=jnp.float32) * 0.3
    b1 = jax.random.normal(k2, (C,), dtype=jnp.float32) * 0.1
    w2 = jax.random.normal(k3, (C, C, K), dtype=jnp.float32) * 0.3
    b2 = jax.random.normal(k4, (C,), dtype=jnp.float32) * 0.1
    # Non-trivial BN affine params to exercise the gamma/beta folding
    # (PyTorch defaults at init are ones/zeros; semantics are identical).
    gamma = 1.0 + 0.5 * jax.random.normal(k5, (C,), dtype=jnp.float32)
    beta = 0.1 * jax.random.normal(k6, (C,), dtype=jnp.float32)

    forward = make_model_forward(w1, b1, w2, b2, gamma, beta)  # fold/pack once
    out = forward(x)
    out = jax.block_until_ready(out)

    ref = reference_forward(x, w1, b1, w2, b2, gamma, beta)
    assert out.shape == (N, C, L2)
    assert jnp.allclose(out, ref, atol=1e-4, rtol=1e-4), (out, ref)

    print("KERNEL_OK")
</pallas_src>

<mosaic_0001>
module attributes {stable_mosaic.version = 11 : i64} {
  func.func @model_kernel(%arg0: memref<3x6xf32, #tpu.memory_space<vmem>>, %arg1: memref<3x19xf32, #tpu.memory_space<vmem>>, %arg2: memref<3x2xf32, #tpu.memory_space<vmem>>) attributes {dimension_semantics = [], scalar_prefetch = 0 : i64, scratch_operands = 0 : i64, tpu.core_type = #tpu.core_type<tc>} {
    %c0 = arith.constant 0 : index
    %c0_0 = arith.constant 0 : index
    %0 = vector.load %arg0[%c0, %c0_0] : memref<3x6xf32, #tpu.memory_space<vmem>>, vector<3x6xf32>
    %c0_1 = arith.constant 0 : index
    %c0_2 = arith.constant 0 : index
    %1 = vector.load %arg1[%c0_1, %c0_2] : memref<3x19xf32, #tpu.memory_space<vmem>>, vector<3x19xf32>
    %cst = arith.constant 0.000000e+00 : f32
    %2 = vector.broadcast %cst : f32 to vector<3x4xf32>
    %3 = vector.extract_strided_slice %1 {offsets = [0, 0], sizes = [3, 1], strides = [1, 1]} : vector<3x19xf32> to vector<3x1xf32>
    %4 = vector.extract_strided_slice %0 {offsets = [0, 0], sizes = [1, 4], strides = [1, 1]} : vector<3x6xf32> to vector<1x4xf32>
    %5 = vector.broadcast %3 : vector<3x1xf32> to vector<3x4xf32>
    %6 = vector.broadcast %4 : vector<1x4xf32> to vector<3x4xf32>
    %7 = arith.mulf %5, %6 : vector<3x4xf32>
    %8 = arith.addf %2, %7 : vector<3x4xf32>
    %9 = vector.extract_strided_slice %1 {offsets = [0, 1], sizes = [3, 1], strides = [1, 1]} : vector<3x19xf32> to vector<3x1xf32>
    %10 = vector.extract_strided_slice %0 {offsets = [0, 1], sizes = [1, 4], strides = [1, 1]} : vector<3x6xf32> to vector<1x4xf32>
    %11 = vector.broadcast %9 : vector<3x1xf32> to vector<3x4xf32>
    %12 = vector.broadcast %10 : vector<1x4xf32> to vector<3x4xf32>
    %13 = arith.mulf %11, %12 : vector<3x4xf32>
    %14 = arith.addf %8, %13 : vector<3x4xf32>
    %15 = vector.extract_strided_slice %1 {offsets = [0, 2], sizes = [3, 1], strides = [1, 1]} : vector<3x19xf32> to vector<3x1xf32>
    %16 = vector.extract_strided_slice %0 {offsets = [0, 2], sizes = [1, 4], strides = [1, 1]} : vector<3x6xf32> to vector<1x4xf32>
    %17 = vector.broadcast %15 : vector<3x1xf32> to vector<3x4xf32>
    %18 = vector.broadcast %16 : vector<1x4xf32> to vector<3x4xf32>
    %19 = arith.mulf %17, %18 : vector<3x4xf32>
    %20 = arith.addf %14, %19 : vector<3x4xf32>
    %21 = vector.extract_strided_slice %1 {offsets = [0, 3], sizes = [3, 1], strides = [1, 1]} : vector<3x19xf32> to vector<3x1xf32>
    %22 = vector.extract_strided_slice %0 {offsets = [1, 0], sizes = [1, 4], strides = [1, 1]} : vector<3x6xf32> to vector<1x4xf32>
    %23 = vector.broadcast %21 : vector<3x1xf32> to vector<3x4xf32>
    %24 = vector.broadcast %22 : vector<1x4xf32> to vector<3x4xf32>
    %25 = arith.mulf %23, %24 : vector<3x4xf32>
    %26 = arith.addf %20, %25 : vector<3x4xf32>
    %27 = vector.extract_strided_slice %1 {offsets = [0, 4], sizes = [3, 1], strides = [1, 1]} : vector<3x19xf32> to vector<3x1xf32>
    %28 = vector.extract_strided_slice %0 {offsets = [1, 1], sizes = [1, 4], strides = [1, 1]} : vector<3x6xf32> to vector<1x4xf32>
    %29 = vector.broadcast %27 : vector<3x1xf32> to vector<3x4xf32>
    %30 = vector.broadcast %28 : vector<1x4xf32> to vector<3x4xf32>
    %31 = arith.mulf %29, %30 : vector<3x4xf32>
    %32 = arith.addf %26, %31 : vector<3x4xf32>
    %33 = vector.extract_strided_slice %1 {offsets = [0, 5], sizes = [3, 1], strides = [1, 1]} : vector<3x19xf32> to vector<3x1xf32>
    %34 = vector.extract_strided_slice %0 {offsets = [1, 2], sizes = [1, 4], strides = [1, 1]} : vector<3x6xf32> to vector<1x4xf32>
    %35 = vector.broadcast %33 : vector<3x1xf32> to vector<3x4xf32>
    %36 = vector.broadcast %34 : vector<1x4xf32> to vector<3x4xf32>
    %37 = arith.mulf %35, %36 : vector<3x4xf32>
    %38 = arith.addf %32, %37 : vector<3x4xf32>
    %39 = vector.extract_strided_slice %1 {offsets = [0, 6], sizes = [3, 1], strides = [1, 1]} : vector<3x19xf32> to vector<3x1xf32>
    %40 = vector.extract_strided_slice %0 {offsets = [2, 0], sizes = [1, 4], strides = [1, 1]} : vector<3x6xf32> to vector<1x4xf32>
    %41 = vector.broadcast %39 : vector<3x1xf32> to vector<3x4xf32>
    %42 = vector.broadcast %40 : vector<1x4xf32> to vector<3x4xf32>
    %43 = arith.mulf %41, %42 : vector<3x4xf32>
    %44 = arith.addf %38, %43 : vector<3x4xf32>
    %45 = vector.extract_strided_slice %1 {offsets = [0, 7], sizes = [3, 1], strides = [1, 1]} : vector<3x19xf32> to vector<3x1xf32>
    %46 = vector.extract_strided_slice %0 {offsets = [2, 1], sizes = [1, 4], strides = [1, 1]} : vector<3x6xf32> to vector<1x4xf32>
    %47 = vector.broadcast %45 : vector<3x1xf32> to vector<3x4xf32>
    %48 = vector.broadcast %46 : vector<1x4xf32> to vector<3x4xf32>
    %49 = arith.mulf %47, %48 : vector<3x4xf32>
    %50 = arith.addf %44, %49 : vector<3x4xf32>
    %51 = vector.extract_strided_slice %1 {offsets = [0, 8], sizes = [3, 1], strides = [1, 1]} : vector<3x19xf32> to vector<3x1xf32>
    %52 = vector.extract_strided_slice %0 {offsets = [2, 2], sizes = [1, 4], strides = [1, 1]} : vector<3x6xf32> to vector<1x4xf32>
    %53 = vector.broadcast %51 : vector<3x1xf32> to vector<3x4xf32>
    %54 = vector.broadcast %52 : vector<1x4xf32> to vector<3x4xf32>
    %55 = arith.mulf %53, %54 : vector<3x4xf32>
    %56 = arith.addf %50, %55 : vector<3x4xf32>
    %cst_3 = arith.constant dense<0.000000e+00> : vector<3xf32>
    %57 = vector.multi_reduction <add>, %56, %cst_3 [1] : vector<3x4xf32> to vector<3xf32>
    %58 = vector.shape_cast %57 : vector<3xf32> to vector<3x1xf32>
    %cst_4 = arith.constant 2.500000e-01 : f32
    %59 = vector.broadcast %cst_4 : f32 to vector<3x1xf32>
    %60 = arith.mulf %58, %59 : vector<3x1xf32>
    %61 = vector.broadcast %60 : vector<3x1xf32> to vector<3x4xf32>
    %62 = arith.subf %56, %61 : vector<3x4xf32>
    %63 = arith.mulf %62, %62 : vector<3x4xf32>
    %cst_5 = arith.constant dense<0.000000e+00> : vector<3xf32>
    %64 = vector.multi_reduction <add>, %63, %cst_5 [1] : vector<3x4xf32> to vector<3xf32>
    %65 = vector.shape_cast %64 : vector<3xf32> to vector<3x1xf32>
    %cst_6 = arith.constant 2.500000e-01 : f32
    %66 = vector.broadcast %cst_6 : f32 to vector<3x1xf32>
    %67 = arith.mulf %65, %66 : vector<3x1xf32>
    %cst_7 = arith.constant 9.99999974E-6 : f32
    %68 = vector.broadcast %cst_7 : f32 to vector<3x1xf32>
    %69 = arith.addf %67, %68 : vector<3x1xf32>
    %70 = math.rsqrt %69 : vector<3x1xf32>
    %71 = vector.broadcast %70 : vector<3x1xf32> to vector<3x4xf32>
    %72 = arith.mulf %62, %71 : vector<3x4xf32>
    %cst_8 = arith.constant 0.000000e+00 : f32
    %73 = vector.broadcast %cst_8 : f32 to vector<3x2xf32>
    %74 = vector.extract_strided_slice %1 {offsets = [0, 9], sizes = [3, 1], strides = [1, 1]} : vector<3x19xf32> to vector<3x1xf32>
    %75 = vector.extract_strided_slice %72 {offsets = [0, 0], sizes = [1, 2], strides = [1, 1]} : vector<3x4xf32> to vector<1x2xf32>
    %76 = vector.broadcast %74 : vector<3x1xf32> to vector<3x2xf32>
    %77 = vector.broadcast %75 : vector<1x2xf32> to vector<3x2xf32>
    %78 = arith.mulf %76, %77 : vector<3x2xf32>
    %79 = arith.addf %73, %78 : vector<3x2xf32>
    %80 = vector.extract_strided_slice %1 {offsets = [0, 10], sizes = [3, 1], strides = [1, 1]} : vector<3x19xf32> to vector<3x1xf32>
    %81 = vector.extract_strided_slice %72 {offsets = [0, 1], sizes = [1, 2], strides = [1, 1]} : vector<3x4xf32> to vector<1x2xf32>
    %82 = vector.broadcast %80 : vector<3x1xf32> to vector<3x2xf32>
    %83 = vector.broadcast %81 : vector<1x2xf32> to vector<3x2xf32>
    %84 = arith.mulf %82, %83 : vector<3x2xf32>
    %85 = arith.addf %79, %84 : vector<3x2xf32>
    %86 = vector.extract_strided_slice %1 {offsets = [0, 11], sizes = [3, 1], strides = [1, 1]} : vector<3x19xf32> to vector<3x1xf32>
    %87 = vector.extract_strided_slice %72 {offsets = [0, 2], sizes = [1, 2], strides = [1, 1]} : vector<3x4xf32> to vector<1x2xf32>
    %88 = vector.broadcast %86 : vector<3x1xf32> to vector<3x2xf32>
    %89 = vector.broadcast %87 : vector<1x2xf32> to vector<3x2xf32>
    %90 = arith.mulf %88, %89 : vector<3x2xf32>
    %91 = arith.addf %85, %90 : vector<3x2xf32>
    %92 = vector.extract_strided_slice %1 {offsets = [0, 12], sizes = [3, 1], strides = [1, 1]} : vector<3x19xf32> to vector<3x1xf32>
    %93 = vector.extract_strided_slice %72 {offsets = [1, 0], sizes = [1, 2], strides = [1, 1]} : vector<3x4xf32> to vector<1x2xf32>
    %94 = vector.broadcast %92 : vector<3x1xf32> to vector<3x2xf32>
    %95 = vector.broadcast %93 : vector<1x2xf32> to vector<3x2xf32>
    %96 = arith.mulf %94, %95 : vector<3x2xf32>
    %97 = arith.addf %91, %96 : vector<3x2xf32>
    %98 = vector.extract_strided_slice %1 {offsets = [0, 13], sizes = [3, 1], strides = [1, 1]} : vector<3x19xf32> to vector<3x1xf32>
    %99 = vector.extract_strided_slice %72 {offsets = [1, 1], sizes = [1, 2], strides = [1, 1]} : vector<3x4xf32> to vector<1x2xf32>
    %100 = vector.broadcast %98 : vector<3x1xf32> to vector<3x2xf32>
    %101 = vector.broadcast %99 : vector<1x2xf32> to vector<3x2xf32>
    %102 = arith.mulf %100, %101 : vector<3x2xf32>
    %103 = arith.addf %97, %102 : vector<3x2xf32>
    %104 = vector.extract_strided_slice %1 {offsets = [0, 14], sizes = [3, 1], strides = [1, 1]} : vector<3x19xf32> to vector<3x1xf32>
    %105 = vector.extract_strided_slice %72 {offsets = [1, 2], sizes = [1, 2], strides = [1, 1]} : vector<3x4xf32> to vector<1x2xf32>
    %106 = vector.broadcast %104 : vector<3x1xf32> to vector<3x2xf32>
    %107 = vector.broadcast %105 : vector<1x2xf32> to vector<3x2xf32>
    %108 = arith.mulf %106, %107 : vector<3x2xf32>
    %109 = arith.addf %103, %108 : vector<3x2xf32>
    %110 = vector.extract_strided_slice %1 {offsets = [0, 15], sizes = [3, 1], strides = [1, 1]} : vector<3x19xf32> to vector<3x1xf32>
    %111 = vector.extract_strided_slice %72 {offsets = [2, 0], sizes = [1, 2], strides = [1, 1]} : vector<3x4xf32> to vector<1x2xf32>
    %112 = vector.broadcast %110 : vector<3x1xf32> to vector<3x2xf32>
    %113 = vector.broadcast %111 : vector<1x2xf32> to vector<3x2xf32>
    %114 = arith.mulf %112, %113 : vector<3x2xf32>
    %115 = arith.addf %109, %114 : vector<3x2xf32>
    %116 = vector.extract_strided_slice %1 {offsets = [0, 16], sizes = [3, 1], strides = [1, 1]} : vector<3x19xf32> to vector<3x1xf32>
    %117 = vector.extract_strided_slice %72 {offsets = [2, 1], sizes = [1, 2], strides = [1, 1]} : vector<3x4xf32> to vector<1x2xf32>
    %118 = vector.broadcast %116 : vector<3x1xf32> to vector<3x2xf32>
    %119 = vector.broadcast %117 : vector<1x2xf32> to vector<3x2xf32>
    %120 = arith.mulf %118, %119 : vector<3x2xf32>
    %121 = arith.addf %115, %120 : vector<3x2xf32>
    %122 = vector.extract_strided_slice %1 {offsets = [0, 17], sizes = [3, 1], strides = [1, 1]} : vector<3x19xf32> to vector<3x1xf32>
    %123 = vector.extract_strided_slice %72 {offsets = [2, 2], sizes = [1, 2], strides = [1, 1]} : vector<3x4xf32> to vector<1x2xf32>
    %124 = vector.broadcast %122 : vector<3x1xf32> to vector<3x2xf32>
    %125 = vector.broadcast %123 : vector<1x2xf32> to vector<3x2xf32>
    %126 = arith.mulf %124, %125 : vector<3x2xf32>
    %127 = arith.addf %121, %126 : vector<3x2xf32>
    %128 = vector.extract_strided_slice %1 {offsets = [0, 18], sizes = [3, 1], strides = [1, 1]} : vector<3x19xf32> to vector<3x1xf32>
    %129 = vector.broadcast %128 : vector<3x1xf32> to vector<3x2xf32>
    %130 = arith.addf %127, %129 : vector<3x2xf32>
    %c0_9 = arith.constant 0 : index
    %c0_10 = arith.constant 0 : index
    %131 = vector.load %arg2[%c0_9, %c0_10] : memref<3x2xf32, #tpu.memory_space<vmem>>, vector<3x2xf32>
    tpu.vector_store %arg2[%c0_9, %c0_10], %130 {strides = array<i32>} : memref<3x2xf32, #tpu.memory_space<vmem>>, vector<3x2xf32>,
    return
  }
}

</mosaic_0001>

<llo_original>
// kernel: forward.1
$region0: #{forward.1}
  #allocation0 [shape = 'u32[]', space=smem, size = 0x4, offset = 0x4, fixed_abs, tag = 'smem constant byte address 0x4 - core index']
  #allocation1 [shape = 'u32[144,128]{1,0:T(1,128)}', space=vmem, size = 0x12000, scoped, tag = 'internal scratch']
  %s0 = inlined_call_operand.vmem [shape: f32[3,6], index: 0, kind: input, shape index: {}]
  %s1 = inlined_call_operand.vmem [shape: f32[3,19], index: 1, kind: input, shape index: {}]
  %s2 = inlined_call_operand.vmem [shape: f32[3,2], index: 2, kind: output, shape index: {}]
  %s3 = sld [smem:[#allocation0]]
  $region18: #{forward.1} parent=0
    _
  %s5 = ssub.s32 1, %s3
  %s6 = scalar_select 0, %s5, %s3
  // Predicated region
  $region2: #{forward.1} parent=0 // pred_check
    _
  $region3: #{forward.1} parent=0 // pred_check_branch
    %8 = sbr.rel (0) target = $region5
  $region4: #{forward.1} parent=0 // pred_region
    _
  $region5: #{forward.1} parent=0 // pred_fallthru
    _
  // Predicated region
  $region6: #{forward.1} parent=0 // pred_check
    _
  $region7: #{forward.1} parent=0 // pred_check_branch
    %10 = sbr.rel (0) target = $region9
  $region8: #{forward.1} parent=0 // pred_region
    _
  $region9: #{forward.1} parent=0 // pred_fallthru
    _
  %v11 = vld [vmem:[%s0] sm:$0x7]
  %v12 = vld [vmem:[%s1] sm:$0x7]
  %14 = vset.pattern.permute.xlu0 0
  %15 = vperm.xlu0 %14, %v12
  %v16 = vpop.permute.xlu0 %15
  %v18 = vlaneseq
  %v19 = vshrl.u32 %v18, 7
  %v20 = vsub.s32 0, %v19
  %v21 = vrot.slane %v11, %v20
  %v22 = vmul.f32 %v16, %v21
  %v23 = vadd.f32 %v22, 0.0
  %24 = vset.pattern.permute.xlu0 1
  %25 = vperm.xlu0 %24, %v12
  %v26 = vpop.permute.xlu0 %25
  %v28 = vmul.f32 %v26, %v21
  %30 = vrot.lane.b32.xlu0 %v28, 127
  %v31 = vpop.permute.xlu0 %30
  %v33 = vadd.f32 %v23, %v31
  %34 = vset.pattern.permute.xlu0 2
  %35 = vperm.xlu0 %34, %v12
  %v36 = vpop.permute.xlu0 %35
  %v38 = vmul.f32 %v36, %v21
  %40 = vrot.lane.b32.xlu0 %v38, 126
  %v41 = vpop.permute.xlu0 %40
  %v43 = vadd.f32 %v33, %v41
  %44 = vset.pattern.permute.xlu0 3
  %45 = vperm.xlu0 %44, %v12
  %v46 = vpop.permute.xlu0 %45
  %v48 = vlaneseq
  %v49 = vshrl.u32 %v48, 7
  %v50 = vsub.s32 1, %v49
  %v51 = vrot.slane %v11, %v50
  %v52 = vmul.f32 %v46, %v51
  %v53 = vadd.f32 %v43, %v52
  %54 = vset.pattern.permute.xlu0 4
  %55 = vperm.xlu0 %54, %v12
  %v56 = vpop.permute.xlu0 %55
  %v58 = vmul.f32 %v56, %v51
  %60 = vrot.lane.b32.xlu0 %v58, 127
  %v61 = vpop.permute.xlu0 %60
  %v63 = vadd.f32 %v53, %v61
  %64 = vset.pattern.permute.xlu0 5
  %65 = vperm.xlu0 %64, %v12
  %v66 = vpop.permute.xlu0 %65
  %v68 = vmul.f32 %v66, %v51
  %70 = vrot.lane.b32.xlu0 %v68, 126
  %v71 = vpop.permute.xlu0 %70
  %v73 = vadd.f32 %v63, %v71
  %74 = vset.pattern.permute.xlu0 6
  %75 = vperm.xlu0 %74, %v12
  %v76 = vpop.permute.xlu0 %75
  %v78 = vlaneseq
  %v79 = vshrl.u32 %v78, 7
  %v80 = vsub.s32 2, %v79
  %v81 = vrot.slane %v11, %v80
  %v82 = vmul.f32 %v76, %v81
  %v83 = vadd.f32 %v73, %v82
  %84 = vset.pattern.permute.xlu0 7
  %85 = vperm.xlu0 %84, %v12
  %v86 = vpop.permute.xlu0 %85
  %v88 = vmul.f32 %v86, %v81
  %90 = vrot.lane.b32.xlu0 %v88, 127
  %v91 = vpop.permute.xlu0 %90
  %v93 = vadd.f32 %v83, %v91
  %94 = vset.pattern.permute.xlu0 8
  %95 = vperm.xlu0 %94, %v12
  %v96 = vpop.permute.xlu0 %95
  %v98 = vmul.f32 %v96, %v81
  %100 = vrot.lane.b32.xlu0 %v98, 126
  %v101 = vpop.permute.xlu0 %100
  %v103 = vadd.f32 %v93, %v101
  %vm104 = vcmask 26624
  %v105 = vsel %vm104, %v103, 0.0
  %106 = vadd.xlane.f32.xlu0 %v105
  %v107 = vpop.xlane.xlu0 %106
  %v108 = vmul.f32 %v107, 0.25
  %v109 = vsub.f32 %v103, %v108
  %v110 = vmul.f32 %v109, %v109
  %v111 = vsel %vm104, %v110, 0.0
  %112 = vadd.xlane.f32.xlu0 %v111
  %v113 = vpop.xlane.xlu0 %112
  %v114 = vmul.f32 %v113, 0.25
  %v115 = vadd.f32 %v114, 1e-05
  %v116 = vrsqrt.pop %v115
  %v117 = vmul.f32 %v109, %v116
  %118 = vset.pattern.permute.xlu0 9
  %119 = vperm.xlu0 %118, %v12
  %v120 = vpop.permute.xlu0 %119
  %v122 = vlaneseq
  %v123 = vshrl.u32 %v122, 7
  %v124 = vsub.s32 0, %v123
  %v125 = vrot.slane %v117, %v124
  %v126 = vmul.f32 %v120, %v125
  %v127 = vadd.f32 %v126, 0.0
  %128 = vset.pattern.permute.xlu0 10
  %129 = vperm.xlu0 %128, %v12
  %v130 = vpop.permute.xlu0 %129
  %v132 = vmul.f32 %v130, %v125
  %134 = vrot.lane.b32.xlu0 %v132, 127
  %v135 = vpop.permute.xlu0 %134
  %v137 = vadd.f32 %v127, %v135
  %138 = vset.pattern.permute.xlu0 11
  %139 = vperm.xlu0 %138, %v12
  %v140 = vpop.permute.xlu0 %139
  %v142 = vmul.f32 %v140, %v125
  %144 = vrot.lane.b32.xlu0 %v142, 126
  %v145 = vpop.permute.xlu0 %144
  %v147 = vadd.f32 %v137, %v145
  %148 = vset.pattern.permute.xlu0 12
  %149 = vperm.xlu0 %148, %v12
  %v150 = vpop.permute.xlu0 %149
  %v152 = vlaneseq
  %v153 = vshrl.u32 %v152, 7
  %v154 = vsub.s32 1, %v153
  %v155 = vrot.slane %v117, %v154
  %v156 = vmul.f32 %v150, %v155
  %v157 = vadd.f32 %v147, %v156
  %158 = vset.pattern.permute.xlu0 13
  %159 = vperm.xlu0 %158, %v12
  %v160 = vpop.permute.xlu0 %159
  %v162 = vmul.f32 %v160, %v155
  %164 = vrot.lane.b32.xlu0 %v162, 127
  %v165 = vpop.permute.xlu0 %164
  %v167 = vadd.f32 %v157, %v165
  %168 = vset.pattern.permute.xlu0 14
  %169 = vperm.xlu0 %168, %v12
  %v170 = vpop.permute.xlu0 %169
  %v172 = vmul.f32 %v170, %v155
  %174 = vrot.lane.b32.xlu0 %v172, 126
  %v175 = vpop.permute.xlu0 %174
  %v177 = vadd.f32 %v167, %v175
  %178 = vset.pattern.permute.xlu0 15
  %179 = vperm.xlu0 %178, %v12
  %v180 = vpop.permute.xlu0 %179
  %v182 = vlaneseq
  %v183 = vshrl.u32 %v182, 7
  %v184 = vsub.s32 2, %v183
  %v185 = vrot.slane %v117, %v184
  %v186 = vmul.f32 %v180, %v185
  %v187 = vadd.f32 %v177, %v186
  %188 = vset.pattern.permute.xlu0 16
  %189 = vperm.xlu0 %188, %v12
  %v190 = vpop.permute.xlu0 %189
  %v192 = vmul.f32 %v190, %v185
  %194 = vrot.lane.b32.xlu0 %v192, 127
  %v195 = vpop.permute.xlu0 %194
  %v197 = vadd.f32 %v187, %v195
  %198 = vset.pattern.permute.xlu0 17
  %199 = vperm.xlu0 %198, %v12
  %v200 = vpop.permute.xlu0 %199
  %v202 = vmul.f32 %v200, %v185
  %204 = vrot.lane.b32.xlu0 %v202, 126
  %v205 = vpop.permute.xlu0 %204
  %v207 = vadd.f32 %v197, %v205
  %208 = vset.pattern.permute.xlu0 18
  %209 = vperm.xlu0 %208, %v12
  %v210 = vpop.permute.xlu0 %209
  %v212 = vadd.f32 %v207, %v210
  %vm213 = vcmask 10240
  %214 = vst.msk [vmem:[%s2] sm:$0x7] %vm213, %v212
  // Predicated region
  $region10: #{forward.1} parent=0 // pred_check
    _
  $region11: #{forward.1} parent=0 // pred_check_branch
    %216 = sbr.rel (0) target = $region13
  $region12: #{forward.1} parent=0 // pred_region
    _
  $region13: #{forward.1} parent=0 // pred_fallthru
    _
  // Predicated region
  $region14: #{forward.1} parent=0 // pred_check
    _
  $region15: #{forward.1} parent=0 // pred_check_branch
    %218 = sbr.rel (0) target = $region17
  $region16: #{forward.1} parent=0 // pred_region
    _
  $region17: #{forward.1} parent=0 // pred_fallthru
    _

</llo_original>
